<compile_context>
chip_gen: v7x
topology: tpu7x:2x2x1
jax: 0.10.0
libtpu: 0.0.40
codegen_flags: <defaults>
</compile_context>

<pallas_src>
import jax
import jax.numpy as jnp
from jax.experimental import pallas as pl
from jax.experimental.pallas import tpu as pltpu


def _make_conv3x3_relu_kernel(*, N, H, W, KH, KW, Cin, Cout, padding, KP):
    HW = H * W
    L = N * HW
    Ktaps = KH * KW * Cin

    def _mod(q, m):
        # within-image index; power-of-two fast path (one VPU AND)
        return (q & (m - 1)) if (m & (m - 1)) == 0 else (q % m)

    def kernel(x_ref, w_ref, o_ref, im2col_ref):
        # x_ref:      (N, Cin, HW)    lane-dense activations (all images)
        # w_ref:      (Cout, KP)      im2col weights; column Ktaps = bias, rest 0
        # o_ref:      (N, Cout, HW)   lane-dense output
        # im2col_ref: (KP, L) f32     VMEM scratch: packed taps + ones/zero rows

        # Merge the batch into the lane axis (HW is a multiple of 128 -> free).
        x = jnp.concatenate([x_ref[n] for n in range(N)], axis=1)  # (Cin, L)

        # Within-image indices for the zero-padding border masks.
        q = jax.lax.broadcasted_iota(jnp.int32, (1, L), 1)   # concatenated index
        p = _mod(q, HW)                                      # flat pixel index in its image
        col = _mod(q, W)                                     # column index in its image

        row_ok = {}
        for d in range(-padding, KH - padding):
            if d < 0:
                row_ok[d] = p >= (-d) * W
            elif d > 0:
                row_ok[d] = p < (H - d) * W
            else:
                row_ok[d] = None
        col_ok = {}
        for d in range(-padding, KW - padding):
            if d < 0:
                col_ok[d] = col >= (-d)
            elif d > 0:
                col_ok[d] = col < (W - d)
            else:
                col_ok[d] = None

        # Pack the KH*KW shifted/masked taps into the im2col scratch.
        for kh in range(KH):
            for kw in range(KW):
                t = kh * KW + kw
                dh, dw = kh - padding, kw - padding
                off = dh * W + dw
                # xt[:, q] = x[:, q + off]; cross-image / out-of-image wraps are
                # zeroed by the masks below.
                xt = x if off == 0 else pltpu.roll(x, (-off) % L, 1)
                ok = row_ok[dh]
                if col_ok[dw] is not None:
                    ok = col_ok[dw] if ok is None else (ok & col_ok[dw])
                if ok is not None:
                    xt = jnp.where(ok, xt, 0.0)
                im2col_ref[pl.ds(t * Cin, Cin), :] = xt.astype(jnp.float32)

        # Padding rows: row Ktaps = ones (bias column of w_ref), rest = zeros.
        pad_rows = KP - Ktaps
        sub = jax.lax.broadcasted_iota(jnp.int32, (pad_rows, L), 0)
        im2col_ref[pl.ds(Ktaps, pad_rows), :] = jnp.where(sub == 0, 1.0, 0.0)

        # One MXU matmul for the whole batch (bias folded in), fused ReLU.
        z = jnp.dot(w_ref[...].astype(jnp.float32), im2col_ref[...],
                    preferred_element_type=jnp.float32)        # (Cout, L)
        y = jnp.maximum(z, 0.0).astype(o_ref.dtype)

        # Split the lane axis back into per-image tiles (128-aligned slices).
        for n in range(N):
            o_ref[n] = y[:, n * HW:(n + 1) * HW]

    return kernel


def ivano_conv(x_nchw, weight_oihw, bias, *, stride=1, padding=1):
    """Conv2d ('same', stride=1) + ReLU. x: (N, Cin, H, W) NCHW; weight: (Cout, Cin, KH, KW)."""
    N, Cin, H, W = x_nchw.shape
    Cout, _, KH, KW = weight_oihw.shape
    assert stride == 1, "kernel implements the module defaults (stride=1)"
    Hout = H + 2 * padding - KH + 1
    Wout = W + 2 * padding - KW + 1
    assert (Hout, Wout) == (H, W), "kernel implements 'same' conv (module defaults k=3, p=1)"
    HW = H * W
    L = N * HW
    Ktaps = KH * KW * Cin
    KP = ((Ktaps + 1 + 7) // 8) * 8   # taps + bias row, rounded up to a sublane group

    # Glue (tiny, layout-preserving):
    #  - activations: row-major reshape NCHW -> (N, Cin, H*W)   (no HBM transpose/pad pass)
    #  - weights:     (Cout,Cin,KH,KW) -> (Cout, KH*KW*Cin); bias appended as an
    #                 extra column (folded into the matmul via a ones row) and
    #                 zero-padded to KP columns.
    x_flat = x_nchw.reshape(N, Cin, HW)
    w2 = jnp.transpose(weight_oihw, (0, 2, 3, 1)).reshape(Cout, Ktaps)
    w_aug = jnp.concatenate(
        [w2, bias.reshape(Cout, 1).astype(w2.dtype),
         jnp.zeros((Cout, KP - Ktaps - 1), w2.dtype)], axis=1)   # (Cout, KP)

    kernel = _make_conv3x3_relu_kernel(N=N, H=H, W=W, KH=KH, KW=KW,
                                       Cin=Cin, Cout=Cout, padding=padding, KP=KP)

    flops = 2 * N * HW * Cout * Cin * KH * KW
    bytes_accessed = (x_flat.size * x_flat.dtype.itemsize
                      + w_aug.size * w_aug.dtype.itemsize
                      + N * Cout * HW * x_nchw.dtype.itemsize)

    out_flat = pl.pallas_call(
        kernel,
        out_shape=jax.ShapeDtypeStruct((N, Cout, HW), x_nchw.dtype),
        grid_spec=pltpu.PrefetchScalarGridSpec(
            num_scalar_prefetch=0,
            grid=(1,),   # single invocation: batch merged into lanes in-kernel
            in_specs=[
                pl.BlockSpec((N, Cin, HW), lambda i: (0, 0, 0)),
                pl.BlockSpec((Cout, KP), lambda i: (0, 0)),
            ],
            out_specs=pl.BlockSpec((N, Cout, HW), lambda i: (0, 0, 0)),
            scratch_shapes=[pltpu.VMEM((KP, L), jnp.float32)],
        ),
        compiler_params=pltpu.CompilerParams(dimension_semantics=("arbitrary",)),
        cost_estimate=pl.CostEstimate(flops=flops, transcendentals=0,
                                      bytes_accessed=bytes_accessed),
    )(x_flat, w_aug)

    # Row-major reshape back to NCHW (free).
    return out_flat.reshape(N, Cout, H, W)


if __name__ == "__main__":
    # Module config: IvanoConv(in_dim=4, out_dim=8), input x: (N=2, C=4, H=16, W=16)
    in_dim, out_dim, ksize = 4, 8, 3
    N, H, W = 2, 16, 16

    key = jax.random.PRNGKey(0)
    kx, kw_, kb = jax.random.split(key, 3)

    # Deterministic synthetic parameters (PyTorch-like uniform fan-in scaling).
    fan_in = in_dim * ksize * ksize
    bound = 1.0 / (fan_in ** 0.5)
    weight = jax.random.uniform(kw_, (out_dim, in_dim, ksize, ksize),
                                jnp.float32, -bound, bound)
    bias = jax.random.uniform(kb, (out_dim,), jnp.float32, -bound, bound)
    x = jax.random.normal(kx, (N, in_dim, H, W), jnp.float32)

    out = jax.jit(ivano_conv)(x, weight, bias)
    out = jax.block_until_ready(out)

    # Reference check against XLA conv (NCHW, OIHW), same padding=1, stride=1.
    ref = jax.lax.conv_general_dilated(
        x, weight, window_strides=(1, 1), padding=((1, 1), (1, 1)),
        dimension_numbers=("NCHW", "OIHW", "NCHW"))
    ref = jnp.maximum(ref + bias[None, :, None, None], 0.0)

    assert out.shape == (N, out_dim, H, W), out.shape
    max_err = float(jnp.max(jnp.abs(out - ref)))
    assert jnp.allclose(out, ref, atol=1e-4, rtol=1e-4), max_err

    print("KERNEL_OK")
</pallas_src>

<mosaic_0001>
module attributes {stable_mosaic.version = 11 : i64} {
  func.func @kernel(%arg0: i32, %arg1: memref<2x4x256xf32, #tpu.memory_space<vmem>>, %arg2: memref<8x40xf32, #tpu.memory_space<vmem>>, %arg3: memref<2x8x256xf32, #tpu.memory_space<vmem>>, %arg4: memref<40x512xf32, #tpu.memory_space<vmem>>) attributes {dimension_semantics = [#tpu.dimension_semantics<arbitrary>], iteration_bounds = array<i64: 1>, scalar_prefetch = 0 : i64, scratch_operands = 1 : i64, tpu.core_type = #tpu.core_type<tc>, window_params = [{pipeline_mode = #tpu.pipeline_mode<synchronous>, transform_indices = @transform_0, window_bounds = array<i64: 2, 4, 256>}, {pipeline_mode = #tpu.pipeline_mode<synchronous>, transform_indices = @transform_1, window_bounds = array<i64: 8, 40>}, {pipeline_mode = #tpu.pipeline_mode<synchronous>, transform_indices = @transform_2, window_bounds = array<i64: 2, 8, 256>}]} {
    %c0 = arith.constant 0 : index
    %c0_0 = arith.constant 0 : index
    %c0_1 = arith.constant 0 : index
    %0 = vector.load %arg1[%c0, %c0_0, %c0_1] : memref<2x4x256xf32, #tpu.memory_space<vmem>>, vector<1x4x256xf32>
    %1 = vector.shape_cast %0 : vector<1x4x256xf32> to vector<4x256xf32>
    %c1 = arith.constant 1 : index
    %c0_2 = arith.constant 0 : index
    %c0_3 = arith.constant 0 : index
    %2 = vector.load %arg1[%c1, %c0_2, %c0_3] : memref<2x4x256xf32, #tpu.memory_space<vmem>>, vector<1x4x256xf32>
    %3 = vector.shape_cast %2 : vector<1x4x256xf32> to vector<4x256xf32>
    %4 = tpu.concatenate %1, %3 in 1 : vector<4x256xf32>, vector<4x256xf32> -> vector<4x512xf32>
    %5 = tpu.iota {dimensions = array<i32: 1>} : vector<1x512xi32>
    %c255_i32 = arith.constant 255 : i32
    %6 = vector.broadcast %c255_i32 : i32 to vector<1x512xi32>
    %7 = arith.andi %5, %6 : vector<1x512xi32>
    %c15_i32 = arith.constant 15 : i32
    %8 = vector.broadcast %c15_i32 : i32 to vector<1x512xi32>
    %9 = arith.andi %5, %8 : vector<1x512xi32>
    %c16_i32 = arith.constant 16 : i32
    %10 = vector.broadcast %c16_i32 : i32 to vector<1x512xi32>
    %11 = arith.cmpi sge, %7, %10 : vector<1x512xi32>
    %c240_i32 = arith.constant 240 : i32
    %12 = vector.broadcast %c240_i32 : i32 to vector<1x512xi32>
    %13 = arith.cmpi slt, %7, %12 : vector<1x512xi32>
    %c1_i32 = arith.constant 1 : i32
    %14 = vector.broadcast %c1_i32 : i32 to vector<1x512xi32>
    %15 = arith.cmpi sge, %9, %14 : vector<1x512xi32>
    %c15_i32_4 = arith.constant 15 : i32
    %16 = vector.broadcast %c15_i32_4 : i32 to vector<1x512xi32>
    %17 = arith.cmpi slt, %9, %16 : vector<1x512xi32>
    %c17_i32 = arith.constant 17 : i32
    %18 = tpu.dynamic_rotate %4 by %c17_i32 dim 1 : vector<4x512xf32>, i32 -> vector<4x512xf32>
    %19 = arith.andi %11, %15 : vector<1x512xi1>
    %cst = arith.constant 0.000000e+00 : f32
    %20 = vector.shape_cast %19 : vector<1x512xi1> to vector<1x512xi1>
    %21 = vector.broadcast %20 : vector<1x512xi1> to vector<4x512xi1>
    %22 = vector.broadcast %cst : f32 to vector<4x512xf32>
    %23 = arith.select %21, %18, %22 : vector<4x512xi1>, vector<4x512xf32>
    %c0_5 = arith.constant 0 : index
    %c0_6 = arith.constant 0 : index
    %24 = vector.load %arg4[%c0_5, %c0_6] : memref<40x512xf32, #tpu.memory_space<vmem>>, vector<4x512xf32>
    tpu.vector_store %arg4[%c0_5, %c0_6], %23 {strides = array<i32>} : memref<40x512xf32, #tpu.memory_space<vmem>>, vector<4x512xf32>,
    %c16_i32_7 = arith.constant 16 : i32
    %25 = tpu.dynamic_rotate %4 by %c16_i32_7 dim 1 : vector<4x512xf32>, i32 -> vector<4x512xf32>
    %cst_8 = arith.constant 0.000000e+00 : f32
    %26 = vector.shape_cast %11 : vector<1x512xi1> to vector<1x512xi1>
    %27 = vector.broadcast %26 : vector<1x512xi1> to vector<4x512xi1>
    %28 = vector.broadcast %cst_8 : f32 to vector<4x512xf32>
    %29 = arith.select %27, %25, %28 : vector<4x512xi1>, vector<4x512xf32>
    %c4 = arith.constant 4 : index
    %c0_9 = arith.constant 0 : index
    %30 = vector.load %arg4[%c4, %c0_9] : memref<40x512xf32, #tpu.memory_space<vmem>>, vector<4x512xf32>
    tpu.vector_store %arg4[%c4, %c0_9], %29 {strides = array<i32>} : memref<40x512xf32, #tpu.memory_space<vmem>>, vector<4x512xf32>,
    %c15_i32_10 = arith.constant 15 : i32
    %31 = tpu.dynamic_rotate %4 by %c15_i32_10 dim 1 : vector<4x512xf32>, i32 -> vector<4x512xf32>
    %32 = arith.andi %11, %17 : vector<1x512xi1>
    %cst_11 = arith.constant 0.000000e+00 : f32
    %33 = vector.shape_cast %32 : vector<1x512xi1> to vector<1x512xi1>
    %34 = vector.broadcast %33 : vector<1x512xi1> to vector<4x512xi1>
    %35 = vector.broadcast %cst_11 : f32 to vector<4x512xf32>
    %36 = arith.select %34, %31, %35 : vector<4x512xi1>, vector<4x512xf32>
    %c8 = arith.constant 8 : index
    %c0_12 = arith.constant 0 : index
    %37 = vector.load %arg4[%c8, %c0_12] : memref<40x512xf32, #tpu.memory_space<vmem>>, vector<4x512xf32>
    tpu.vector_store %arg4[%c8, %c0_12], %36 {strides = array<i32>} : memref<40x512xf32, #tpu.memory_space<vmem>>, vector<4x512xf32>,
    %c1_i32_13 = arith.constant 1 : i32
    %38 = tpu.dynamic_rotate %4 by %c1_i32_13 dim 1 : vector<4x512xf32>, i32 -> vector<4x512xf32>
    %cst_14 = arith.constant 0.000000e+00 : f32
    %39 = vector.shape_cast %15 : vector<1x512xi1> to vector<1x512xi1>
    %40 = vector.broadcast %39 : vector<1x512xi1> to vector<4x512xi1>
    %41 = vector.broadcast %cst_14 : f32 to vector<4x512xf32>
    %42 = arith.select %40, %38, %41 : vector<4x512xi1>, vector<4x512xf32>
    %c12 = arith.constant 12 : index
    %c0_15 = arith.constant 0 : index
    %43 = vector.load %arg4[%c12, %c0_15] : memref<40x512xf32, #tpu.memory_space<vmem>>, vector<4x512xf32>
    tpu.vector_store %arg4[%c12, %c0_15], %42 {strides = array<i32>} : memref<40x512xf32, #tpu.memory_space<vmem>>, vector<4x512xf32>,
    %c16 = arith.constant 16 : index
    %c0_16 = arith.constant 0 : index
    %44 = vector.load %arg4[%c16, %c0_16] : memref<40x512xf32, #tpu.memory_space<vmem>>, vector<4x512xf32>
    tpu.vector_store %arg4[%c16, %c0_16], %4 {strides = array<i32>} : memref<40x512xf32, #tpu.memory_space<vmem>>, vector<4x512xf32>,
    %c511_i32 = arith.constant 511 : i32
    %45 = tpu.dynamic_rotate %4 by %c511_i32 dim 1 : vector<4x512xf32>, i32 -> vector<4x512xf32>
    %cst_17 = arith.constant 0.000000e+00 : f32
    %46 = vector.shape_cast %17 : vector<1x512xi1> to vector<1x512xi1>
    %47 = vector.broadcast %46 : vector<1x512xi1> to vector<4x512xi1>
    %48 = vector.broadcast %cst_17 : f32 to vector<4x512xf32>
    %49 = arith.select %47, %45, %48 : vector<4x512xi1>, vector<4x512xf32>
    %c20 = arith.constant 20 : index
    %c0_18 = arith.constant 0 : index
    %50 = vector.load %arg4[%c20, %c0_18] : memref<40x512xf32, #tpu.memory_space<vmem>>, vector<4x512xf32>
    tpu.vector_store %arg4[%c20, %c0_18], %49 {strides = array<i32>} : memref<40x512xf32, #tpu.memory_space<vmem>>, vector<4x512xf32>,
    %c497_i32 = arith.constant 497 : i32
    %51 = tpu.dynamic_rotate %4 by %c497_i32 dim 1 : vector<4x512xf32>, i32 -> vector<4x512xf32>
    %52 = arith.andi %13, %15 : vector<1x512xi1>
    %cst_19 = arith.constant 0.000000e+00 : f32
    %53 = vector.shape_cast %52 : vector<1x512xi1> to vector<1x512xi1>
    %54 = vector.broadcast %53 : vector<1x512xi1> to vector<4x512xi1>
    %55 = vector.broadcast %cst_19 : f32 to vector<4x512xf32>
    %56 = arith.select %54, %51, %55 : vector<4x512xi1>, vector<4x512xf32>
    %c24 = arith.constant 24 : index
    %c0_20 = arith.constant 0 : index
    %57 = vector.load %arg4[%c24, %c0_20] : memref<40x512xf32, #tpu.memory_space<vmem>>, vector<4x512xf32>
    tpu.vector_store %arg4[%c24, %c0_20], %56 {strides = array<i32>} : memref<40x512xf32, #tpu.memory_space<vmem>>, vector<4x512xf32>,
    %c496_i32 = arith.constant 496 : i32
    %58 = tpu.dynamic_rotate %4 by %c496_i32 dim 1 : vector<4x512xf32>, i32 -> vector<4x512xf32>
    %cst_21 = arith.constant 0.000000e+00 : f32
    %59 = vector.shape_cast %13 : vector<1x512xi1> to vector<1x512xi1>
    %60 = vector.broadcast %59 : vector<1x512xi1> to vector<4x512xi1>
    %61 = vector.broadcast %cst_21 : f32 to vector<4x512xf32>
    %62 = arith.select %60, %58, %61 : vector<4x512xi1>, vector<4x512xf32>
    %c28 = arith.constant 28 : index
    %c0_22 = arith.constant 0 : index
    %63 = vector.load %arg4[%c28, %c0_22] : memref<40x512xf32, #tpu.memory_space<vmem>>, vector<4x512xf32>
    tpu.vector_store %arg4[%c28, %c0_22], %62 {strides = array<i32>} : memref<40x512xf32, #tpu.memory_space<vmem>>, vector<4x512xf32>,
    %c495_i32 = arith.constant 495 : i32
    %64 = tpu.dynamic_rotate %4 by %c495_i32 dim 1 : vector<4x512xf32>, i32 -> vector<4x512xf32>
    %65 = arith.andi %13, %17 : vector<1x512xi1>
    %cst_23 = arith.constant 0.000000e+00 : f32
    %66 = vector.shape_cast %65 : vector<1x512xi1> to vector<1x512xi1>
    %67 = vector.broadcast %66 : vector<1x512xi1> to vector<4x512xi1>
    %68 = vector.broadcast %cst_23 : f32 to vector<4x512xf32>
    %69 = arith.select %67, %64, %68 : vector<4x512xi1>, vector<4x512xf32>
    %c32 = arith.constant 32 : index
    %c0_24 = arith.constant 0 : index
    %70 = vector.load %arg4[%c32, %c0_24] : memref<40x512xf32, #tpu.memory_space<vmem>>, vector<4x512xf32>
    tpu.vector_store %arg4[%c32, %c0_24], %69 {strides = array<i32>} : memref<40x512xf32, #tpu.memory_space<vmem>>, vector<4x512xf32>,
    %71 = tpu.iota {dimensions = array<i32: 0>} : vector<4x512xi32>
    %c0_i32 = arith.constant 0 : i32
    %72 = vector.broadcast %c0_i32 : i32 to vector<4x512xi32>
    %73 = arith.cmpi eq, %71, %72 : vector<4x512xi32>
    %cst_25 = arith.constant 1.000000e+00 : f32
    %cst_26 = arith.constant 0.000000e+00 : f32
    %74 = vector.broadcast %cst_25 : f32 to vector<4x512xf32>
    %75 = vector.broadcast %cst_26 : f32 to vector<4x512xf32>
    %76 = arith.select %73, %74, %75 : vector<4x512xi1>, vector<4x512xf32>
    %c36 = arith.constant 36 : index
    %c0_27 = arith.constant 0 : index
    %77 = vector.load %arg4[%c36, %c0_27] : memref<40x512xf32, #tpu.memory_space<vmem>>, vector<4x512xf32>
    tpu.vector_store %arg4[%c36, %c0_27], %76 {strides = array<i32>} : memref<40x512xf32, #tpu.memory_space<vmem>>, vector<4x512xf32>,
    %c0_28 = arith.constant 0 : index
    %c0_29 = arith.constant 0 : index
    %78 = vector.load %arg2[%c0_28, %c0_29] : memref<8x40xf32, #tpu.memory_space<vmem>>, vector<8x40xf32>
    %c0_30 = arith.constant 0 : index
    %c0_31 = arith.constant 0 : index
    %79 = vector.load %arg4[%c0_30, %c0_31] : memref<40x512xf32, #tpu.memory_space<vmem>>, vector<40x512xf32>
    %cst_32 = arith.constant dense<0.000000e+00> : vector<8x512xf32>
    %80 = tpu.matmul %78, %79, %cst_32 {dimension_numbers = #tpu.dot_dimension_numbers<[1], [0], [0], [1], [0, 0, 1, 1], [], []>} : vector<8x40xf32>, vector<40x512xf32>, vector<8x512xf32> -> vector<8x512xf32>
    %cst_33 = arith.constant 0.000000e+00 : f32
    %81 = vector.broadcast %cst_33 : f32 to vector<8x512xf32>
    %82 = arith.maximumf %80, %81 : vector<8x512xf32>
    %83 = vector.extract_strided_slice %82 {offsets = [0, 0], sizes = [8, 256], strides = [1, 1]} : vector<8x512xf32> to vector<8x256xf32>
    %c0_34 = arith.constant 0 : index
    %c0_35 = arith.constant 0 : index
    %c0_36 = arith.constant 0 : index
    %84 = vector.load %arg3[%c0_34, %c0_35, %c0_36] : memref<2x8x256xf32, #tpu.memory_space<vmem>>, vector<1x8x256xf32>
    %85 = vector.shape_cast %84 : vector<1x8x256xf32> to vector<8x256xf32>
    %86 = vector.shape_cast %83 : vector<8x256xf32> to vector<1x8x256xf32>
    tpu.vector_store %arg3[%c0_34, %c0_35, %c0_36], %86 {strides = array<i32>} : memref<2x8x256xf32, #tpu.memory_space<vmem>>, vector<1x8x256xf32>,
    %87 = vector.extract_strided_slice %82 {offsets = [0, 256], sizes = [8, 256], strides = [1, 1]} : vector<8x512xf32> to vector<8x256xf32>
    %c1_37 = arith.constant 1 : index
    %c0_38 = arith.constant 0 : index
    %c0_39 = arith.constant 0 : index
    %88 = vector.load %arg3[%c1_37, %c0_38, %c0_39] : memref<2x8x256xf32, #tpu.memory_space<vmem>>, vector<1x8x256xf32>
    %89 = vector.shape_cast %88 : vector<1x8x256xf32> to vector<8x256xf32>
    %90 = vector.shape_cast %87 : vector<8x256xf32> to vector<1x8x256xf32>
    tpu.vector_store %arg3[%c1_37, %c0_38, %c0_39], %90 {strides = array<i32>} : memref<2x8x256xf32, #tpu.memory_space<vmem>>, vector<1x8x256xf32>,
    return
  }
  func.func @transform_0(%arg0: i32) -> (i32, i32, i32) {
    %c0_i32 = arith.constant 0 : i32
    %c0_i32_0 = arith.constant 0 : i32
    %c0_i32_1 = arith.constant 0 : i32
    %c0_i32_2 = arith.constant 0 : i32
    return %c0_i32, %c0_i32_0, %c0_i32_1 : i32, i32, i32
  }
  func.func @transform_1(%arg0: i32) -> (i32, i32) {
    %c0_i32 = arith.constant 0 : i32
    %c0_i32_0 = arith.constant 0 : i32
    %c0_i32_1 = arith.constant 0 : i32
    return %c0_i32, %c0_i32_0 : i32, i32
  }
  func.func @transform_2(%arg0: i32) -> (i32, i32, i32) {
    %c0_i32 = arith.constant 0 : i32
    %c0_i32_0 = arith.constant 0 : i32
    %c0_i32_1 = arith.constant 0 : i32
    %c0_i32_2 = arith.constant 0 : i32
    return %c0_i32, %c0_i32_0, %c0_i32_1 : i32, i32, i32
  }
}

</mosaic_0001>

<llo_original>
// kernel: ivano_conv.1
$region0: #{ivano_conv.1}
  #allocation0 [shape = 'u32[]', space=smem, size = 0x4, offset = 0x4, fixed_abs, tag = 'smem constant byte address 0x4 - core index']
  #allocation1 [shape = 'u32[144,128]{1,0:T(1,128)}', space=vmem, size = 0x12000, scoped, tag = 'internal scratch']
  #allocation2 [shape = 'f32[40,512]{1,0:T(8,128)}', space=vmem, size = 0x14000, scoped, tag = 'scratch operand']
  %s0 = inlined_call_operand.vmem [shape: f32[2,4,256], index: 0, kind: input, shape index: {}]
  %s1 = inlined_call_operand.vmem [shape: f32[8,40], index: 1, kind: input, shape index: {}]
  %s2 = inlined_call_operand.vmem [shape: f32[2,8,256], index: 2, kind: output, shape index: {}]
  %s3 = sld [smem:[#allocation0]]
  $region18: #{ivano_conv.1} parent=0
    _
  %s5 = ssub.s32 1, %s3
  %s6 = scalar_select 0, %s5, %s3
  // Predicated region
  $region2: #{ivano_conv.1} parent=0 // pred_check
    _
  $region3: #{ivano_conv.1} parent=0 // pred_check_branch
    %8 = sbr.rel (0) target = $region5
  $region4: #{ivano_conv.1} parent=0 // pred_region
    _
  $region5: #{ivano_conv.1} parent=0 // pred_fallthru
    _
  // Predicated region
  $region6: #{ivano_conv.1} parent=0 // pred_check
    _
  $region7: #{ivano_conv.1} parent=0 // pred_check_branch
    %10 = sbr.rel (0) target = $region9
  $region8: #{ivano_conv.1} parent=0 // pred_region
    _
  $region9: #{ivano_conv.1} parent=0 // pred_fallthru
    _
  %v11 = vld [vmem:[%s0] sm:$0xff]
  %s12 = scalar_lea.vmem %s0, 8
  %v13 = vld [vmem:[%s12] sm:$0xff]
  %v15 = vcombine.high %v11, %v11
  %v18 = vcombine.high %v13, %v13
  %v20 = vlaneseq
  %v21 = vand.u32 %v20, 127
  %v22 = vadd.s32 %v21, 128
  %v23 = vadd.s32 %v21, 256
  %v24 = vadd.s32 %v21, 384
  %v25 = vand.u32 %v21, 255
  %v26 = vand.u32 %v22, 255
  %v27 = vand.u32 %v23, 255
  %v28 = vand.u32 %v24, 255
  %v29 = vand.u32 %v21, 15
  %v30 = vand.u32 %v22, 15
  %v31 = vand.u32 %v23, 15
  %v32 = vand.u32 %v24, 15
  %vm33 = vcmp.ge.s32.totalorder %v25, 16
  %vm34 = vcmp.ge.s32.totalorder %v26, 16
  %vm35 = vcmp.ge.s32.totalorder %v27, 16
  %vm36 = vcmp.ge.s32.totalorder %v28, 16
  %vm37 = vcmp.lt.s32.totalorder %v25, 240
  %vm38 = vcmp.lt.s32.totalorder %v26, 240
  %vm39 = vcmp.lt.s32.totalorder %v27, 240
  %vm40 = vcmp.lt.s32.totalorder %v28, 240
  %vm41 = vcmp.ge.s32.totalorder %v29, 1
  %vm42 = vcmp.ge.s32.totalorder %v30, 1
  %vm43 = vcmp.ge.s32.totalorder %v31, 1
  %vm44 = vcmp.ge.s32.totalorder %v32, 1
  %vm45 = vcmp.lt.s32.totalorder %v29, 15
  %vm46 = vcmp.lt.s32.totalorder %v30, 15
  %vm47 = vcmp.lt.s32.totalorder %v31, 15
  %vm48 = vcmp.lt.s32.totalorder %v32, 15
  %49 = vrot.lane.b32.xlu0 %v11, 17
  %v50 = vpop.permute.xlu0 %49
  %51 = vrot.lane.b32.xlu0 %v15, 17
  %v52 = vpop.permute.xlu0 %51
  %53 = vrot.lane.b32.xlu0 %v13, 17
  %v54 = vpop.permute.xlu0 %53
  %55 = vrot.lane.b32.xlu0 %v18, 17
  %v56 = vpop.permute.xlu0 %55
  %vm57 = vcmp.lt.s32.totalorder %v21, 17
  %v58 = vsel %vm57, %v54, %v56
  %v59 = vsel %vm57, %v52, %v54
  %v60 = vsel %vm57, %v50, %v52
  %v61 = vsel %vm57, %v56, %v50
  %vm62 = vmand %vm33, %vm41
  %vm63 = vmand %vm34, %vm42
  %vm64 = vmand %vm35, %vm43
  %vm65 = vmand %vm36, %vm44
  %v66 = vsel %vm62, 1, 0
  %v67 = vsel %vm63, 1, 0
  %v68 = vsel %vm64, 1, 0
  %v69 = vsel %vm65, 1, 0
  %vm70 = vcmp.eq.s32.totalorder %v66, 1
  %vm71 = vcmp.eq.s32.totalorder %v67, 1
  %vm72 = vcmp.eq.s32.totalorder %v68, 1
  %vm73 = vcmp.eq.s32.totalorder %v69, 1
  %v74 = vsel %vm70, %v61, 0.0
  %v75 = vsel %vm71, %v60, 0.0
  %v76 = vsel %vm72, %v59, 0.0
  %v77 = vsel %vm73, %v58, 0.0
  %78 = vst [vmem:[#allocation2] sm:$0xf] %v74
  %79 = vst [vmem:[#allocation2 + $0x8] sm:$0xf] %v75
  %80 = vst [vmem:[#allocation2 + $0x10] sm:$0xf] %v76
  %81 = vst [vmem:[#allocation2 + $0x18] sm:$0xf] %v77
  %82 = vrot.lane.b32.xlu0 %v11, 16
  %v83 = vpop.permute.xlu0 %82
  %84 = vrot.lane.b32.xlu0 %v15, 16
  %v85 = vpop.permute.xlu0 %84
  %86 = vrot.lane.b32.xlu0 %v13, 16
  %v87 = vpop.permute.xlu0 %86
  %88 = vrot.lane.b32.xlu0 %v18, 16
  %v89 = vpop.permute.xlu0 %88
  %vm90 = vcmp.lt.s32.totalorder %v21, 16
  %v91 = vsel %vm90, %v87, %v89
  %v92 = vsel %vm90, %v85, %v87
  %v93 = vsel %vm90, %v83, %v85
  %v94 = vsel %vm90, %v89, %v83
  %v95 = vsel %vm33, 1, 0
  %v96 = vsel %vm34, 1, 0
  %v97 = vsel %vm35, 1, 0
  %v98 = vsel %vm36, 1, 0
  %vm99 = vcmp.eq.s32.totalorder %v95, 1
  %vm100 = vcmp.eq.s32.totalorder %v96, 1
  %vm101 = vcmp.eq.s32.totalorder %v97, 1
  %vm102 = vcmp.eq.s32.totalorder %v98, 1
  %v103 = vsel %vm99, %v94, 0.0
  %v104 = vsel %vm100, %v93, 0.0
  %v105 = vsel %vm101, %v92, 0.0
  %v106 = vsel %vm102, %v91, 0.0
  %v111 = vrot.slane %v103, 4
  %v112 = vrot.slane %v104, 4
  %v113 = vrot.slane %v105, 4
  %v114 = vrot.slane %v106, 4
  %119 = vst [vmem:[#allocation2] sm:$0xf0] %v111
  %120 = vst [vmem:[#allocation2 + $0x8] sm:$0xf0] %v112
  %121 = vst [vmem:[#allocation2 + $0x10] sm:$0xf0] %v113
  %122 = vst [vmem:[#allocation2 + $0x18] sm:$0xf0] %v114
  %123 = vrot.lane.b32.xlu0 %v11, 15
  %v124 = vpop.permute.xlu0 %123
  %125 = vrot.lane.b32.xlu0 %v15, 15
  %v126 = vpop.permute.xlu0 %125
  %127 = vrot.lane.b32.xlu0 %v13, 15
  %v128 = vpop.permute.xlu0 %127
  %129 = vrot.lane.b32.xlu0 %v18, 15
  %v130 = vpop.permute.xlu0 %129
  %vm131 = vcmp.lt.s32.totalorder %v21, 15
  %v132 = vsel %vm131, %v128, %v130
  %v133 = vsel %vm131, %v126, %v128
  %v134 = vsel %vm131, %v124, %v126
  %v135 = vsel %vm131, %v130, %v124
  %vm136 = vmand %vm33, %vm45
  %vm137 = vmand %vm34, %vm46
  %vm138 = vmand %vm35, %vm47
  %vm139 = vmand %vm36, %vm48
  %v140 = vsel %vm136, 1, 0
  %v141 = vsel %vm137, 1, 0
  %v142 = vsel %vm138, 1, 0
  %v143 = vsel %vm139, 1, 0
  %vm144 = vcmp.eq.s32.totalorder %v140, 1
  %vm145 = vcmp.eq.s32.totalorder %v141, 1
  %vm146 = vcmp.eq.s32.totalorder %v142, 1
  %vm147 = vcmp.eq.s32.totalorder %v143, 1
  %v148 = vsel %vm144, %v135, 0.0
  %v149 = vsel %vm145, %v134, 0.0
  %v150 = vsel %vm146, %v133, 0.0
  %v151 = vsel %vm147, %v132, 0.0
  %152 = vst [vmem:[#allocation2 + $0x20] sm:$0xf] %v148
  %153 = vst [vmem:[#allocation2 + $0x28] sm:$0xf] %v149
  %154 = vst [vmem:[#allocation2 + $0x30] sm:$0xf] %v150
  %155 = vst [vmem:[#allocation2 + $0x38] sm:$0xf] %v151
  %156 = vrot.lane.b32.xlu0 %v11, 1
  %v157 = vpop.permute.xlu0 %156
  %158 = vrot.lane.b32.xlu0 %v15, 1
  %v159 = vpop.permute.xlu0 %158
  %160 = vrot.lane.b32.xlu0 %v13, 1
  %v161 = vpop.permute.xlu0 %160
  %162 = vrot.lane.b32.xlu0 %v18, 1
  %v163 = vpop.permute.xlu0 %162
  %vm164 = vcmp.lt.s32.totalorder %v21, 1
  %v165 = vsel %vm164, %v161, %v163
  %v166 = vsel %vm164, %v159, %v161
  %v167 = vsel %vm164, %v157, %v159
  %v168 = vsel %vm164, %v163, %v157
  %v169 = vsel %vm41, 1, 0
  %v170 = vsel %vm42, 1, 0
  %v171 = vsel %vm43, 1, 0
  %v172 = vsel %vm44, 1, 0
  %vm173 = vcmp.eq.s32.totalorder %v169, 1
  %vm174 = vcmp.eq.s32.totalorder %v170, 1
  %vm175 = vcmp.eq.s32.totalorder %v171, 1
  %vm176 = vcmp.eq.s32.totalorder %v172, 1
  %v177 = vsel %vm173, %v168, 0.0
  %v178 = vsel %vm174, %v167, 0.0
  %v179 = vsel %vm175, %v166, 0.0
  %v180 = vsel %vm176, %v165, 0.0
  %v185 = vrot.slane %v177, 4
  %v186 = vrot.slane %v178, 4
  %v187 = vrot.slane %v179, 4
  %v188 = vrot.slane %v180, 4
  %193 = vst [vmem:[#allocation2 + $0x20] sm:$0xf0] %v185
  %194 = vst [vmem:[#allocation2 + $0x28] sm:$0xf0] %v186
  %195 = vst [vmem:[#allocation2 + $0x30] sm:$0xf0] %v187
  %196 = vst [vmem:[#allocation2 + $0x38] sm:$0xf0] %v188
  %197 = vst [vmem:[#allocation2 + $0x40] sm:$0xf] %v11
  %198 = vst [vmem:[#allocation2 + $0x48] sm:$0xf] %v15
  %199 = vst [vmem:[#allocation2 + $0x50] sm:$0xf] %v13
  %200 = vst [vmem:[#allocation2 + $0x58] sm:$0xf] %v18
  %201 = vrot.lane.b32.xlu0 %v11, 127
  %v202 = vpop.permute.xlu0 %201
  %203 = vrot.lane.b32.xlu0 %v15, 127
  %v204 = vpop.permute.xlu0 %203
  %205 = vrot.lane.b32.xlu0 %v13, 127
  %v206 = vpop.permute.xlu0 %205
  %207 = vrot.lane.b32.xlu0 %v18, 127
  %v208 = vpop.permute.xlu0 %207
  %vm209 = vcmp.lt.s32.totalorder %v21, 127
  %v210 = vsel %vm209, %v206, %v208
  %v211 = vsel %vm209, %v204, %v206
  %v212 = vsel %vm209, %v202, %v204
  %v213 = vsel %vm209, %v208, %v202
  %v214 = vsel %vm45, 1, 0
  %v215 = vsel %vm46, 1, 0
  %v216 = vsel %vm47, 1, 0
  %v217 = vsel %vm48, 1, 0
  %vm218 = vcmp.eq.s32.totalorder %v214, 1
  %vm219 = vcmp.eq.s32.totalorder %v215, 1
  %vm220 = vcmp.eq.s32.totalorder %v216, 1
  %vm221 = vcmp.eq.s32.totalorder %v217, 1
  %v222 = vsel %vm218, %v212, 0.0
  %v223 = vsel %vm219, %v211, 0.0
  %v224 = vsel %vm220, %v210, 0.0
  %v225 = vsel %vm221, %v213, 0.0
  %v230 = vrot.slane %v222, 4
  %v231 = vrot.slane %v223, 4
  %v232 = vrot.slane %v224, 4
  %v233 = vrot.slane %v225, 4
  %238 = vst [vmem:[#allocation2 + $0x40] sm:$0xf0] %v230
  %239 = vst [vmem:[#allocation2 + $0x48] sm:$0xf0] %v231
  %240 = vst [vmem:[#allocation2 + $0x50] sm:$0xf0] %v232
  %241 = vst [vmem:[#allocation2 + $0x58] sm:$0xf0] %v233
  %242 = vrot.lane.b32.xlu0 %v11, 113
  %v243 = vpop.permute.xlu0 %242
  %244 = vrot.lane.b32.xlu0 %v15, 113
  %v245 = vpop.permute.xlu0 %244
  %246 = vrot.lane.b32.xlu0 %v13, 113
  %v247 = vpop.permute.xlu0 %246
  %248 = vrot.lane.b32.xlu0 %v18, 113
  %v249 = vpop.permute.xlu0 %248
  %vm250 = vcmp.lt.s32.totalorder %v21, 113
  %v251 = vsel %vm250, %v247, %v249
  %v252 = vsel %vm250, %v245, %v247
  %v253 = vsel %vm250, %v243, %v245
  %v254 = vsel %vm250, %v249, %v243
  %vm255 = vmand %vm37, %vm41
  %vm256 = vmand %vm38, %vm42
  %vm257 = vmand %vm39, %vm43
  %vm258 = vmand %vm40, %vm44
  %v259 = vsel %vm255, 1, 0
  %v260 = vsel %vm256, 1, 0
  %v261 = vsel %vm257, 1, 0
  %v262 = vsel %vm258, 1, 0
  %vm263 = vcmp.eq.s32.totalorder %v259, 1
  %vm264 = vcmp.eq.s32.totalorder %v260, 1
  %vm265 = vcmp.eq.s32.totalorder %v261, 1
  %vm266 = vcmp.eq.s32.totalorder %v262, 1
  %v267 = vsel %vm263, %v253, 0.0
  %v268 = vsel %vm264, %v252, 0.0
  %v269 = vsel %vm265, %v251, 0.0
  %v270 = vsel %vm266, %v254, 0.0
  %271 = vst [vmem:[#allocation2 + $0x60] sm:$0xf] %v267
  %272 = vst [vmem:[#allocation2 + $0x68] sm:$0xf] %v268
  %273 = vst [vmem:[#allocation2 + $0x70] sm:$0xf] %v269
  %274 = vst [vmem:[#allocation2 + $0x78] sm:$0xf] %v270
  %275 = vrot.lane.b32.xlu0 %v11, 112
  %v276 = vpop.permute.xlu0 %275
  %277 = vrot.lane.b32.xlu0 %v15, 112
  %v278 = vpop.permute.xlu0 %277
  %279 = vrot.lane.b32.xlu0 %v13, 112
  %v280 = vpop.permute.xlu0 %279
  %281 = vrot.lane.b32.xlu0 %v18, 112
  %v282 = vpop.permute.xlu0 %281
  %vm283 = vcmp.lt.s32.totalorder %v21, 112
  %v284 = vsel %vm283, %v280, %v282
  %v285 = vsel %vm283, %v278, %v280
  %v286 = vsel %vm283, %v276, %v278
  %v287 = vsel %vm283, %v282, %v276
  %v288 = vsel %vm37, 1, 0
  %v289 = vsel %vm38, 1, 0
  %v290 = vsel %vm39, 1, 0
  %v291 = vsel %vm40, 1, 0
  %vm292 = vcmp.eq.s32.totalorder %v288, 1
  %vm293 = vcmp.eq.s32.totalorder %v289, 1
  %vm294 = vcmp.eq.s32.totalorder %v290, 1
  %vm295 = vcmp.eq.s32.totalorder %v291, 1
  %v296 = vsel %vm292, %v286, 0.0
  %v297 = vsel %vm293, %v285, 0.0
  %v298 = vsel %vm294, %v284, 0.0
  %v299 = vsel %vm295, %v287, 0.0
  %v304 = vrot.slane %v296, 4
  %v305 = vrot.slane %v297, 4
  %v306 = vrot.slane %v298, 4
  %v307 = vrot.slane %v299, 4
  %312 = vst [vmem:[#allocation2 + $0x60] sm:$0xf0] %v304
  %313 = vst [vmem:[#allocation2 + $0x68] sm:$0xf0] %v305
  %314 = vst [vmem:[#allocation2 + $0x70] sm:$0xf0] %v306
  %315 = vst [vmem:[#allocation2 + $0x78] sm:$0xf0] %v307
  %316 = vrot.lane.b32.xlu0 %v11, 111
  %v317 = vpop.permute.xlu0 %316
  %318 = vrot.lane.b32.xlu0 %v15, 111
  %v319 = vpop.permute.xlu0 %318
  %320 = vrot.lane.b32.xlu0 %v13, 111
  %v321 = vpop.permute.xlu0 %320
  %322 = vrot.lane.b32.xlu0 %v18, 111
  %v323 = vpop.permute.xlu0 %322
  %vm324 = vcmp.lt.s32.totalorder %v21, 111
  %v325 = vsel %vm324, %v321, %v323
  %v326 = vsel %vm324, %v319, %v321
  %v327 = vsel %vm324, %v317, %v319
  %v328 = vsel %vm324, %v323, %v317
  %vm329 = vmand %vm37, %vm45
  %vm330 = vmand %vm38, %vm46
  %vm331 = vmand %vm39, %vm47
  %vm332 = vmand %vm40, %vm48
  %v333 = vsel %vm329, 1, 0
  %v334 = vsel %vm330, 1, 0
  %v335 = vsel %vm331, 1, 0
  %v336 = vsel %vm332, 1, 0
  %vm337 = vcmp.eq.s32.totalorder %v333, 1
  %vm338 = vcmp.eq.s32.totalorder %v334, 1
  %vm339 = vcmp.eq.s32.totalorder %v335, 1
  %vm340 = vcmp.eq.s32.totalorder %v336, 1
  %v341 = vsel %vm337, %v327, 0.0
  %v342 = vsel %vm338, %v326, 0.0
  %v343 = vsel %vm339, %v325, 0.0
  %v344 = vsel %vm340, %v328, 0.0
  %345 = vst [vmem:[#allocation2 + $0x80] sm:$0xf] %v341
  %346 = vst [vmem:[#allocation2 + $0x88] sm:$0xf] %v342
  %347 = vst [vmem:[#allocation2 + $0x90] sm:$0xf] %v343
  %348 = vst [vmem:[#allocation2 + $0x98] sm:$0xf] %v344
  %v349 = vlaneseq
  %v350 = vshrl.u32 %v349, 7
  %vm351 = vcmp.eq.s32.totalorder %v350, 0
  %v352 = vsel %vm351, 1.0, 0.0
  %v354 = vrot.slane %v352, 4
  %356 = vst [vmem:[#allocation2 + $0x80] sm:$0xf0] %v354
  %357 = vst [vmem:[#allocation2 + $0x88] sm:$0xf0] %v354
  %358 = vst [vmem:[#allocation2 + $0x90] sm:$0xf0] %v354
  %359 = vst [vmem:[#allocation2 + $0x98] sm:$0xf0] %v354
  %v360 = vld [vmem:[%s1] sm:$0xff]
  %v361 = vld [vmem:[#allocation2] sm:$0xff]
  %v362 = vld [vmem:[#allocation2 + $0x8] sm:$0xff]
  %v363 = vld [vmem:[#allocation2 + $0x10] sm:$0xff]
  %v364 = vld [vmem:[#allocation2 + $0x18] sm:$0xff]
  %v365 = vld [vmem:[#allocation2 + $0x20] sm:$0xff]
  %v366 = vld [vmem:[#allocation2 + $0x28] sm:$0xff]
  %v367 = vld [vmem:[#allocation2 + $0x30] sm:$0xff]
  %v368 = vld [vmem:[#allocation2 + $0x38] sm:$0xff]
  %v369 = vld [vmem:[#allocation2 + $0x40] sm:$0xff]
  %v370 = vld [vmem:[#allocation2 + $0x48] sm:$0xff]
  %v371 = vld [vmem:[#allocation2 + $0x50] sm:$0xff]
  %v372 = vld [vmem:[#allocation2 + $0x58] sm:$0xff]
  %v373 = vld [vmem:[#allocation2 + $0x60] sm:$0xff]
  %v374 = vld [vmem:[#allocation2 + $0x68] sm:$0xff]
  %v375 = vld [vmem:[#allocation2 + $0x70] sm:$0xff]
  %v376 = vld [vmem:[#allocation2 + $0x78] sm:$0xff]
  %v377 = vld [vmem:[#allocation2 + $0x80] sm:$0xff]
  %v378 = vld [vmem:[#allocation2 + $0x88] sm:$0xff]
  %v379 = vld [vmem:[#allocation2 + $0x90] sm:$0xff]
  %v380 = vld [vmem:[#allocation2 + $0x98] sm:$0xff]
  %vm381 = vcmask 326656
  %v383 = vsel %vm381, %v360, 0
  %385 = vmatprep.subr.mxu0 %v362
  %386 = vmatpush1.msra.mxu0 %v361
  %387 = vmatprep.subr.mxu0 %v366
  %388 = vmatpush1.msra.mxu0 %v365
  %389 = vmatprep.subr.mxu0 %v370
  %390 = vmatpush1.msra.mxu0 %v369
  %391 = vmatprep.subr.mxu0 %v374
  %392 = vmatpush1.msra.mxu0 %v373
  %393 = vmatprep.subr.mxu0 %v378
  %394 = vmatpush1.msra.mxu0 %v377
  %395 = vmatprep.subr.mxu0 0.0
  %396 = vmatpush1.msra.mxu0 0.0
  %397 = vmatprep.subr.mxu0 0.0
  %398 = vmatpush1.msra.mxu0 0.0
  %399 = vmatprep.subr.mxu0 0.0
  %400 = vmatpush1.msra.mxu0 0.0
  %401 = vmatprep.subr.mxu0 0.0
  %402 = vmatpush1.msra.mxu0 0.0
  %403 = vmatprep.subr.mxu0 0.0
  %404 = vmatpush1.msra.mxu0 0.0
  %405 = vmatprep.subr.mxu0 0.0
  %406 = vmatpush1.msra.mxu0 0.0
  %407 = vmatprep.subr.mxu0 0.0
  %408 = vmatpush1.msra.mxu0 0.0
  %409 = vmatprep.subr.mxu0 0.0
  %410 = vmatpush1.msra.mxu0 0.0
  %411 = vmatprep.subr.mxu0 0.0
  %412 = vmatpush1.msra.mxu0 0.0
  %413 = vmatprep.subr.mxu0 0.0
  %414 = vmatpush1.msra.mxu0 0.0
  %415 = vmatprep.subr.mxu0 0.0
  %416 = vmatpush1.msra.mxu0 0.0
  %417 = vmatprep.subr.mxu0 0.0
  %418 = vmatpush1.msra.mxu0 0.0
  %419 = vmatprep.subr.mxu0 0.0
  %420 = vmatpush1.msra.mxu0 0.0
  %421 = vmatprep.subr.mxu0 0.0
  %422 = vmatpush1.msra.mxu0 0.0
  %423 = vmatprep.subr.mxu0 0.0
  %424 = vmatpush1.msra.mxu0 0.0
  %425 = vmatprep.subr.mxu0 0.0
  %426 = vmatpush1.msra.mxu0 0.0
  %427 = vmatprep.subr.mxu0 0.0
  %428 = vmatpush1.msra.mxu0 0.0
  %429 = vmatprep.subr.mxu0 0.0
  %430 = vmatpush1.msra.mxu0 0.0
  %431 = vmatprep.subr.mxu0 0.0
  %432 = vmatpush1.msra.mxu0 0.0
  %433 = vmatprep.subr.mxu0 0.0
  %434 = vmatpush1.msra.mxu0 0.0
  %435 = vmatprep.subr.mxu0 0.0
  %436 = vmatpush1.msra.mxu0 0.0
  %437 = vmatprep.subr.mxu0 0.0
  %438 = vmatpush1.msra.mxu0 0.0
  %439 = vmatprep.subr.mxu0 0.0
  %440 = vmatpush1.msra.mxu0 0.0
  %441 = vmatprep.subr.mxu0 0.0
  %442 = vmatpush1.msra.mxu0 0.0
  %443 = vmatprep.subr.mxu0 0.0
  %444 = vmatpush1.msra.mxu0 0.0
  %445 = vmatprep.subr.mxu0 0.0
  %446 = vmatpush1.msra.mxu0 0.0
  %447 = vmatprep.subr.mxu0 0.0
  %448 = vmatpush1.msra.mxu0 0.0
  %449 = vmatprep.mubr.f32.mxu0 0.0
  %450 = vmatmul.mubr.f32.gmra.mrb[0].mxu0 %v383
  %v451 = vpop.f32.mrb[0].mxu0
  %v452 = vadd.f32 0.0, %v451
  %v453 = vpop.f32.mrb[0].mxu0
  %v454 = vadd.f32 0.0, %v453
  %455 = vdwg.mxu0
  %456 = vmatprep.subr.mxu0 %v364
  %457 = vmatpush1.msra.mxu0 %v363
  %458 = vmatprep.subr.mxu0 %v368
  %459 = vmatpush1.msra.mxu0 %v367
  %460 = vmatprep.subr.mxu0 %v372
  %461 = vmatpush1.msra.mxu0 %v371
  %462 = vmatprep.subr.mxu0 %v376
  %463 = vmatpush1.msra.mxu0 %v375
  %464 = vmatprep.subr.mxu0 %v380
  %465 = vmatpush1.msra.mxu0 %v379
  %466 = vmatprep.subr.mxu0 0.0
  %467 = vmatpush1.msra.mxu0 0.0
  %468 = vmatprep.subr.mxu0 0.0
  %469 = vmatpush1.msra.mxu0 0.0
  %470 = vmatprep.subr.mxu0 0.0
  %471 = vmatpush1.msra.mxu0 0.0
  %472 = vmatprep.subr.mxu0 0.0
  %473 = vmatpush1.msra.mxu0 0.0
  %474 = vmatprep.subr.mxu0 0.0
  %475 = vmatpush1.msra.mxu0 0.0
  %476 = vmatprep.subr.mxu0 0.0
  %477 = vmatpush1.msra.mxu0 0.0
  %478 = vmatprep.subr.mxu0 0.0
  %479 = vmatpush1.msra.mxu0 0.0
  %480 = vmatprep.subr.mxu0 0.0
  %481 = vmatpush1.msra.mxu0 0.0
  %482 = vmatprep.subr.mxu0 0.0
  %483 = vmatpush1.msra.mxu0 0.0
  %484 = vmatprep.subr.mxu0 0.0
  %485 = vmatpush1.msra.mxu0 0.0
  %486 = vmatprep.subr.mxu0 0.0
  %487 = vmatpush1.msra.mxu0 0.0
  %488 = vmatprep.subr.mxu0 0.0
  %489 = vmatpush1.msra.mxu0 0.0
  %490 = vmatprep.subr.mxu0 0.0
  %491 = vmatpush1.msra.mxu0 0.0
  %492 = vmatprep.subr.mxu0 0.0
  %493 = vmatpush1.msra.mxu0 0.0
  %494 = vmatprep.subr.mxu0 0.0
  %495 = vmatpush1.msra.mxu0 0.0
  %496 = vmatprep.subr.mxu0 0.0
  %497 = vmatpush1.msra.mxu0 0.0
  %498 = vmatprep.subr.mxu0 0.0
  %499 = vmatpush1.msra.mxu0 0.0
  %500 = vmatprep.subr.mxu0 0.0
  %501 = vmatpush1.msra.mxu0 0.0
  %502 = vmatprep.subr.mxu0 0.0
  %503 = vmatpush1.msra.mxu0 0.0
  %504 = vmatprep.subr.mxu0 0.0
  %505 = vmatpush1.msra.mxu0 0.0
  %506 = vmatprep.subr.mxu0 0.0
  %507 = vmatpush1.msra.mxu0 0.0
  %508 = vmatprep.subr.mxu0 0.0
  %509 = vmatpush1.msra.mxu0 0.0
  %510 = vmatprep.subr.mxu0 0.0
  %511 = vmatpush1.msra.mxu0 0.0
  %512 = vmatprep.subr.mxu0 0.0
  %513 = vmatpush1.msra.mxu0 0.0
  %514 = vmatprep.subr.mxu0 0.0
  %515 = vmatpush1.msra.mxu0 0.0
  %516 = vmatprep.subr.mxu0 0.0
  %517 = vmatpush1.msra.mxu0 0.0
  %518 = vmatprep.subr.mxu0 0.0
  %519 = vmatpush1.msra.mxu0 0.0
  %520 = vmatprep.mubr.f32.mxu0 0.0
  %521 = vmatmul.mubr.f32.gmra.mrb[0].mxu0 %v383
  %v522 = vpop.f32.mrb[0].mxu0
  %v523 = vadd.f32 0.0, %v522
  %v524 = vpop.f32.mrb[0].mxu0
  %v525 = vadd.f32 0.0, %v524
  %526 = vdwg.mxu0
  %v527 = vmax.f32 %v452, 0.0
  %v528 = vmax.f32 %v454, 0.0
  %v529 = vmax.f32 %v523, 0.0
  %v530 = vmax.f32 %v525, 0.0
  %531 = vst [vmem:[%s2] sm:$0xff] %v527
  %532 = vst [vmem:[%s2 + $0x8] sm:$0xff] %v528
  %s533 = scalar_lea.vmem %s2, 16
  %534 = vst [vmem:[%s533] sm:$0xff] %v529
  %535 = vst [vmem:[%s533 + $0x8] sm:$0xff] %v530
  // Predicated region
  $region10: #{ivano_conv.1} parent=0 // pred_check
    _
  $region11: #{ivano_conv.1} parent=0 // pred_check_branch
    %537 = sbr.rel (0) target = $region13
  $region12: #{ivano_conv.1} parent=0 // pred_region
    _
  $region13: #{ivano_conv.1} parent=0 // pred_fallthru
    _
  // Predicated region
  $region14: #{ivano_conv.1} parent=0 // pred_check
    _
  $region15: #{ivano_conv.1} parent=0 // pred_check_branch
    %539 = sbr.rel (0) target = $region17
  $region16: #{ivano_conv.1} parent=0 // pred_region
    _
  $region17: #{ivano_conv.1} parent=0 // pred_fallthru
    _

</llo_original>
